<compile_context>
chip_gen: v7x
topology: tpu7x:2x2x1
jax: 0.10.0
libtpu: 0.0.40
codegen_flags: <defaults>
</compile_context>

<pallas_src>
import math

import jax
import jax.numpy as jnp
from jax.experimental import pallas as pl
from jax.experimental.pallas import tpu as pltpu

SQRT5 = math.sqrt(5.0)
_VMEM_LIMIT_BYTES = 48 * 1024 * 1024   # <= v7x's 64 MiB physical, > v5e scoped default
_VMEM_TILE_BUDGET = 40 * 1024 * 1024   # double-buffered blocks must fit under this


def _round_up(x, mult):
    return ((x + mult - 1) // mult) * mult


def _cdiv(a, b):
    return (a + b - 1) // b


def _finish(sqrd, inv_l2, sigf2, k_ref):
    """Shared tail: squared distance tile -> Matern-5/2 kernel tile."""
    sq = jnp.maximum(sqrd, 1e-30) * inv_l2          # = r^2 (clamp matches torch)
    r = jnp.sqrt(sq)
    k = jnp.exp(-r) * (sq * (1.0 / 3.0) + r + 1.0) * sigf2
    k_ref[...] = k.astype(k_ref.dtype)


def matern52_kernel_vpu(params_ref, x1_ref, x2t_ref, k_ref):
    """VPU path (d <= 3): per-feature accumulation of squared differences.

    params_ref: SMEM (2,) f32 = [5/l^2, sigf^2]
    x1_ref:     VMEM (tn, d) f32 (centered)
    x2t_ref:    VMEM (d, tm) f32 (centered, transposed -> lane-dense rows)
    k_ref:      VMEM (tn, tm) f32 output tile
    """
    inv_l2 = params_ref[0]
    sigf2 = params_ref[1]

    x1 = x1_ref[...]                        # (tn, d)
    x2t = x2t_ref[...]                      # (d, tm)
    tn, d = x1.shape
    tm = x2t.shape[1]

    sqrd = jnp.zeros((tn, tm), jnp.float32)
    for f in range(d):                      # d tiny & static -> unrolled
        df = x1[:, f:f + 1] - x2t[f:f + 1, :]   # (tn,1)-(1,tm) -> (tn,tm)
        sqrd = sqrd + df * df

    _finish(sqrd, inv_l2, sigf2, k_ref)


def matern52_kernel_mxu(params_ref, x1_ref, x2t_ref, n1_ref, n2_ref, k_ref):
    """MXU path (d >= 4): ||a||^2 + ||b||^2 - 2 a.b^T with the cross term on the MXU.

    n1_ref: VMEM (tn, 1) f32  row norms of x1 tile
    n2_ref: VMEM (1, tm) f32  row norms of x2 tile
    """
    inv_l2 = params_ref[0]
    sigf2 = params_ref[1]

    cross = jnp.dot(x1_ref[...], x2t_ref[...],
                    preferred_element_type=jnp.float32)        # (tn, tm)
    sqrd = n1_ref[...] + n2_ref[...] - 2.0 * cross
    _finish(sqrd, inv_l2, sigf2, k_ref)


def _choose_tiles(n, m, d, tn, tm):
    """Shrink tiles for small problems, respect a VMEM budget, keep (8,128)
    alignment, and avoid a (1,1) grid on non-trivial problems (v7x megacore)."""
    tn = min(tn, _round_up(n, 8))
    tm = min(tm, _round_up(m, 128))

    def vmem_bytes(tn_, tm_):
        # double-buffered out tile + x1 tile + x2t tile + row norms, all f32
        return 2 * 4 * (tn_ * tm_ + tn_ * d + d * tm_ + tn_ + tm_)

    while vmem_bytes(tn, tm) > _VMEM_TILE_BUDGET and tm > 128:
        tm = max(128, _round_up(tm // 2, 128))
    while vmem_bytes(tn, tm) > _VMEM_TILE_BUDGET and tn > 8:
        tn = max(8, _round_up(tn // 2, 8))

    # v7x has 2 TensorCores sharded over "parallel" grid axes: make sure a
    # non-trivial problem produces at least 2 grid steps.
    if _cdiv(n, tn) * _cdiv(m, tm) == 1:
        if n >= 16:
            tn = _round_up(_cdiv(n, 2), 8)       # split n, keep tm lane-dense
        elif m >= 256:
            tm = _round_up(_cdiv(m, 2), 128)
    return tn, tm


def matern52(x1, x2, rawlen, rawsigf, *, tn=512, tm=2048):
    """Wrapper: parameter transform + centering in plain JAX, pairwise-kernel
    hot path in Pallas. Returns the (n, m) Matern-5/2 Gram matrix."""
    if x1.ndim == 1:
        x1 = x1[:, None]
    if x2.ndim == 1:
        x2 = x2[:, None]
    x1 = x1.astype(jnp.float32)
    x2 = x2.astype(jnp.float32)

    # Natural parameters (softplus of raw params); fold into the constants the
    # kernel actually needs: 5/l^2 and sigf^2.
    l = jax.nn.softplus(rawlen).reshape(())
    sigf = jax.nn.softplus(rawsigf).reshape(())
    inv_l2 = jnp.float32(5.0) / (l * l)
    sigf2 = sigf * sigf
    params = jnp.stack([inv_l2, sigf2]).astype(jnp.float32)     # (2,) -> SMEM

    # IdentityWarp => x unchanged. Center both inputs by mean of x1.
    mean = x1.mean(axis=0)
    x1c = x1 - mean
    x2c = x2 - mean

    n, d = x1c.shape
    m = x2c.shape[0]

    use_mxu = d >= 4
    if use_mxu and d % 8 != 0:
        # Pad only the (small) feature axis so the contraction dim is 8-aligned;
        # zero padding does not change distances or row norms.
        d_pad = _round_up(d, 8)
        x1c = jnp.pad(x1c, ((0, 0), (0, d_pad - d)))
        x2c = jnp.pad(x2c, ((0, 0), (0, d_pad - d)))
        d = d_pad

    tn, tm = _choose_tiles(n, m, d, tn, tm)
    # j (x2 tiles) outermost, i (x1 tiles) innermost: the big (d, tm) x2t block
    # stays resident across the inner loop; only the small x1/n1 blocks re-DMA.
    grid = (_cdiv(m, tm), _cdiv(n, tn))

    x2t = x2c.T                                                 # (d, m), lane-dense in m

    compiler_params = pltpu.CompilerParams(
        dimension_semantics=("parallel", "parallel"),
        vmem_limit_bytes=_VMEM_LIMIT_BYTES,
    )

    if use_mxu:
        n1 = jnp.sum(x1c * x1c, axis=-1, keepdims=True)         # (n, 1)
        n2 = jnp.sum(x2c * x2c, axis=-1)[None, :]               # (1, m)
        out = pl.pallas_call(
            matern52_kernel_mxu,
            out_shape=jax.ShapeDtypeStruct((n, m), jnp.float32),
            grid_spec=pltpu.PrefetchScalarGridSpec(
                num_scalar_prefetch=0,
                grid=grid,
                in_specs=[
                    pl.BlockSpec(memory_space=pltpu.MemorySpace.SMEM),   # params
                    pl.BlockSpec((tn, d), lambda j, i: (i, 0)),          # x1 rows
                    pl.BlockSpec((d, tm), lambda j, i: (0, j)),          # x2^T cols (resident)
                    pl.BlockSpec((tn, 1), lambda j, i: (i, 0)),          # ||x1||^2
                    pl.BlockSpec((1, tm), lambda j, i: (0, j)),          # ||x2||^2 (resident)
                ],
                out_specs=pl.BlockSpec((tn, tm), lambda j, i: (i, j)),
            ),
            compiler_params=compiler_params,
        )(params, x1c, x2t, n1, n2)
    else:
        out = pl.pallas_call(
            matern52_kernel_vpu,
            out_shape=jax.ShapeDtypeStruct((n, m), jnp.float32),
            grid_spec=pltpu.PrefetchScalarGridSpec(
                num_scalar_prefetch=0,
                grid=grid,
                in_specs=[
                    pl.BlockSpec(memory_space=pltpu.MemorySpace.SMEM),   # params
                    pl.BlockSpec((tn, d), lambda j, i: (i, 0)),          # x1 rows
                    pl.BlockSpec((d, tm), lambda j, i: (0, j)),          # x2^T cols (resident)
                ],
                out_specs=pl.BlockSpec((tn, tm), lambda j, i: (i, j)),
            ),
            compiler_params=compiler_params,
        )(params, x1c, x2t)

    return out


def matern52_reference(x1, x2, rawlen, rawsigf):
    """Pure-JAX reference mirroring the PyTorch forward, for verification."""
    if x1.ndim == 1:
        x1 = x1[:, None]
    if x2.ndim == 1:
        x2 = x2[:, None]
    x1 = x1.astype(jnp.float32)
    x2 = x2.astype(jnp.float32)
    l = jax.nn.softplus(rawlen).reshape(())
    sigf = jax.nn.softplus(rawsigf).reshape(())
    mean = x1.mean(axis=0)
    a = x1 - mean
    b = x2 - mean
    diff = a[:, None, :] - b[None, :, :]
    sqrd = jnp.sum(diff ** 2, axis=-1)
    r = jnp.sqrt(jnp.maximum(sqrd, 1e-30)) * SQRT5 / l
    exp_r = jnp.exp(-r)
    return exp_r * (r ** 2 / 3.0 + r + 1.0) * sigf ** 2


if __name__ == "__main__":
    key = jax.random.PRNGKey(0)
    k1, k2, k3, k4, k5, k6 = jax.random.split(key, 6)

    # Deterministic parameter init matching reset_parameters(len_init=1.0).
    rawlen = jnp.log(jnp.expm1(jnp.float32(1.0))) * jnp.ones((1,), jnp.float32)
    rawsigf = jnp.full((1,), 0.5413, jnp.float32)

    # --- Test 1: tiny d -> VPU path; ragged n/m + megacore tile split. ---
    n1_, m1_, d1_ = 60, 96, 2
    x1a = jax.random.normal(k1, (n1_, d1_), jnp.float32)
    x2a = jax.random.normal(k2, (m1_, d1_), jnp.float32)
    k_out = jax.block_until_ready(matern52(x1a, x2a, rawlen, rawsigf))
    k_ref = matern52_reference(x1a, x2a, rawlen, rawsigf)
    assert k_out.shape == (n1_, m1_)
    assert jnp.allclose(k_out, k_ref, rtol=1e-5, atol=1e-5), "VPU path mismatch"

    # --- Test 2: d=4 -> MXU path with feature padding; ragged n/m. ---
    n2_, m2_, d2_ = 48, 160, 4
    x1b = jax.random.normal(k3, (n2_, d2_), jnp.float32)
    x2b = jax.random.normal(k4, (m2_, d2_), jnp.float32)
    k_out2 = jax.block_until_ready(matern52(x1b, x2b, rawlen, rawsigf))
    k_ref2 = matern52_reference(x1b, x2b, rawlen, rawsigf)
    assert k_out2.shape == (n2_, m2_)
    assert jnp.allclose(k_out2, k_ref2, rtol=1e-3, atol=1e-3), "MXU (d=4) mismatch"

    # --- Test 3: larger d -> MXU path (len_init=4.0 so values are non-trivial). ---
    rawlen2 = jnp.log(jnp.expm1(jnp.float32(4.0))) * jnp.ones((1,), jnp.float32)
    n3_, m3_, d3_ = 128, 256, 32
    x1c_ = jax.random.normal(k5, (n3_, d3_), jnp.float32)
    x2c_ = jax.random.normal(k6, (m3_, d3_), jnp.float32)
    k_out3 = jax.block_until_ready(matern52(x1c_, x2c_, rawlen2, rawsigf))
    k_ref3 = matern52_reference(x1c_, x2c_, rawlen2, rawsigf)
    assert k_out3.shape == (n3_, m3_)
    assert jnp.allclose(k_out3, k_ref3, rtol=1e-3, atol=1e-3), "MXU (d=32) mismatch"

    print("KERNEL_OK")
</pallas_src>

<mosaic_0001>
module attributes {stable_mosaic.version = 11 : i64} {
  func.func @matern52_kernel_vpu(%arg0: i32, %arg1: i32, %arg2: memref<2xf32, #tpu.memory_space<smem>>, %arg3: memref<32x2xf32, #tpu.memory_space<vmem>>, %arg4: memref<2x128xf32, #tpu.memory_space<vmem>>, %arg5: memref<32x128xf32, #tpu.memory_space<vmem>>) attributes {dimension_semantics = [#tpu.dimension_semantics<parallel>, #tpu.dimension_semantics<parallel>], iteration_bounds = array<i64: 1, 2>, scalar_prefetch = 0 : i64, scratch_operands = 0 : i64, tpu.core_type = #tpu.core_type<tc>, window_params = [{transform_indices = @transform_0, window_bounds = array<i64: 2>}, {transform_indices = @transform_1, window_bounds = array<i64: 32, 2>}, {transform_indices = @transform_2, window_bounds = array<i64: 2, 128>}, {transform_indices = @transform_3, window_bounds = array<i64: 32, 128>}]} {
    %c0 = arith.constant 0 : index
    %0 = memref.load %arg2[%c0] : memref<2xf32, #tpu.memory_space<smem>>
    %c1 = arith.constant 1 : index
    %1 = memref.load %arg2[%c1] : memref<2xf32, #tpu.memory_space<smem>>
    %c0_0 = arith.constant 0 : index
    %c0_1 = arith.constant 0 : index
    %2 = vector.load %arg3[%c0_0, %c0_1] : memref<32x2xf32, #tpu.memory_space<vmem>>, vector<32x2xf32>
    %c0_2 = arith.constant 0 : index
    %c0_3 = arith.constant 0 : index
    %3 = vector.load %arg4[%c0_2, %c0_3] : memref<2x128xf32, #tpu.memory_space<vmem>>, vector<2x128xf32>
    %cst = arith.constant 0.000000e+00 : f32
    %4 = vector.broadcast %cst : f32 to vector<32x128xf32>
    %5 = vector.extract_strided_slice %2 {offsets = [0, 0], sizes = [32, 1], strides = [1, 1]} : vector<32x2xf32> to vector<32x1xf32>
    %6 = vector.extract_strided_slice %3 {offsets = [0, 0], sizes = [1, 128], strides = [1, 1]} : vector<2x128xf32> to vector<1x128xf32>
    %7 = vector.broadcast %5 : vector<32x1xf32> to vector<32x128xf32>
    %8 = vector.broadcast %6 : vector<1x128xf32> to vector<32x128xf32>
    %9 = arith.subf %7, %8 : vector<32x128xf32>
    %10 = arith.mulf %9, %9 : vector<32x128xf32>
    %11 = arith.addf %4, %10 : vector<32x128xf32>
    %12 = vector.extract_strided_slice %2 {offsets = [0, 1], sizes = [32, 1], strides = [1, 1]} : vector<32x2xf32> to vector<32x1xf32>
    %13 = vector.extract_strided_slice %3 {offsets = [1, 0], sizes = [1, 128], strides = [1, 1]} : vector<2x128xf32> to vector<1x128xf32>
    %14 = vector.broadcast %12 : vector<32x1xf32> to vector<32x128xf32>
    %15 = vector.broadcast %13 : vector<1x128xf32> to vector<32x128xf32>
    %16 = arith.subf %14, %15 : vector<32x128xf32>
    %17 = arith.mulf %16, %16 : vector<32x128xf32>
    %18 = arith.addf %11, %17 : vector<32x128xf32>
    %cst_4 = arith.constant 1.000000e-30 : f32
    %19 = vector.broadcast %cst_4 : f32 to vector<32x128xf32>
    %20 = arith.maximumf %18, %19 : vector<32x128xf32>
    %21 = vector.broadcast %0 : f32 to vector<32x128xf32>
    %22 = arith.mulf %20, %21 : vector<32x128xf32>
    %23 = math.sqrt %22 : vector<32x128xf32>
    %cst_5 = arith.constant 0.000000e+00 : f32
    %24 = vector.broadcast %cst_5 : f32 to vector<32x128xf32>
    %25 = arith.subf %24, %23 : vector<32x128xf32>
    %26 = math.exp %25 : vector<32x128xf32>
    %cst_6 = arith.constant 0.333333343 : f32
    %27 = vector.broadcast %cst_6 : f32 to vector<32x128xf32>
    %28 = arith.mulf %22, %27 : vector<32x128xf32>
    %29 = arith.addf %28, %23 : vector<32x128xf32>
    %cst_7 = arith.constant 1.000000e+00 : f32
    %30 = vector.broadcast %cst_7 : f32 to vector<32x128xf32>
    %31 = arith.addf %29, %30 : vector<32x128xf32>
    %32 = arith.mulf %26, %31 : vector<32x128xf32>
    %33 = vector.broadcast %1 : f32 to vector<32x128xf32>
    %34 = arith.mulf %32, %33 : vector<32x128xf32>
    %c0_8 = arith.constant 0 : index
    %c0_9 = arith.constant 0 : index
    %35 = vector.load %arg5[%c0_8, %c0_9] : memref<32x128xf32, #tpu.memory_space<vmem>>, vector<32x128xf32>
    tpu.vector_store %arg5[%c0_8, %c0_9], %34 {strides = array<i32>} : memref<32x128xf32, #tpu.memory_space<vmem>>, vector<32x128xf32>,
    return
  }
  func.func @transform_0(%arg0: i32, %arg1: i32) -> i32 {
    %c0_i32 = arith.constant 0 : i32
    %c0_i32_0 = arith.constant 0 : i32
    return %c0_i32 : i32
  }
  func.func @transform_1(%arg0: i32, %arg1: i32) -> (i32, i32) {
    %c0_i32 = arith.constant 0 : i32
    %c0_i32_0 = arith.constant 0 : i32
    return %arg1, %c0_i32 : i32, i32
  }
  func.func @transform_2(%arg0: i32, %arg1: i32) -> (i32, i32) {
    %c0_i32 = arith.constant 0 : i32
    %c0_i32_0 = arith.constant 0 : i32
    return %c0_i32, %arg0 : i32, i32
  }
  func.func @transform_3(%arg0: i32, %arg1: i32) -> (i32, i32) {
    %c0_i32 = arith.constant 0 : i32
    return %arg1, %arg0 : i32, i32
  }
}

</mosaic_0001>

<llo_original>
// kernel: tpu_custom_call.1
$region0: #{tpu_custom_call.1}
  #allocation0 [shape = 'u32[]', space=smem, size = 0x4, offset = 0x4, fixed_abs, tag = 'smem constant byte address 0x4 - core index']
  #allocation1 [shape = 'u32[144,128]{1,0:T(1,128)}', space=vmem, size = 0x12000, scoped, tag = 'internal scratch']
  %s0 = inlined_call_operand.vmem [shape: f32[2], index: 0, kind: input, shape index: {}]
  %s1 = inlined_call_operand.vmem [shape: f32[60,2], index: 1, kind: input, shape index: {}]
  %s2 = inlined_call_operand.vmem [shape: f32[2,96], index: 2, kind: input, shape index: {}]
  %s3 = inlined_call_operand.hbm [shape: f32[60,96], index: 3, kind: output, shape index: {}]
  %s4 = sld [smem:[#allocation0]]
  $region49: #{tpu_custom_call.1} parent=0
    _
  %s6 = ssub.s32 1, %s4
  %s7 = scalar_select 0, %s6, %s4
  $region1: #{tpu_custom_call.1} parent=0
    #allocation2 [shape = 'u8[512]{0}', space=smem, size = 0x200, scoped, tag = 'input window, operand 0, single buffered']
    #allocation3 [shape = 's32[2]{0}', space=sflag, size = 0x8, scoped, tag = 'scoped memory for tpu_custom_call.1']
    #allocation4 [shape = 's32[2]{0}', space=sflag, size = 0x8, scoped, tag = 'scoped memory for tpu_custom_call.1']
    #allocation5 [shape = 'u8[32768]{0}', space=vmem, size = 0x8000, scoped, tag = 'output window, operand 0']
    %8 = vsyncpa [#allocation4], 0
    %9 = vsyncpa [#allocation3], 0
    %s10 = scalar_lea.sflag [#allocation3], 1
    %11 = vsyncpa %s10, 0
    loop: start=0, step=1, limit=4
    $region2: #{tpu_custom_call.1} parent=1 // loop_pre_header
      _
    $region3: #{tpu_custom_call.1} parent=1 // loop_header
      %s13 = sphi 0, %s17
      %p14 = scmp.ge.s32.totalorder %s13, 4
      %s20 = sphi 0, %s32
      %s21 = sphi 0, %s28
      %s22 = sphi 0, %s20
      %s23 = sphi 0, %s21
      %s24 = sphi 0, %s22
      %s25 = sphi 0, %s23
      %s33 = sphi 0, %s33
      %s35 = sphi 0, %s33
      %s36 = sphi 0, %s35
      %s50 = sphi 0, %s36
      %s56 = sphi 0, %s58
      %s59 = sphi 0, %s56
      %s60 = sphi 0, %s59
      %s76 = sphi 0, %s60
      %s82 = sphi 0, %s84
      %s85 = sphi 0, %s82
      %s86 = sphi 0, %s85
      %s102 = sphi 0, %s86
      %s110 = sphi 0, %s112
      %s113 = sphi 0, %s110
      %s114 = sphi 0, %s113
      %s130 = sphi 0, %s114
    $region4: #{tpu_custom_call.1} parent=1 // loop_header_branch
      %16 = sbr.rel (%p14) target = $region8
    $region5: #{tpu_custom_call.1} parent=1 // loop_body
      %s18 = ssub.s32 %s13, 1
      %s19 = ssub.s32 %s13, 2
      %s26 = sadd.s32 1, %s21
      %p27 = scmp.ge.s32.totalorder %s26, 2
      %s28 = scalar_select %p27, 0, %s26
      %s29 = sadd.s32 1, %s20
      %s30 = scalar_select %p27, %s29, %s20
      %p31 = scmp.ge.s32.totalorder %s30, 1
      %s32 = scalar_select %p31, 0, %s30
      %s34 = sadd.s32 %s33, 1
      %p37 = scmp.eq.s32.totalorder %s13, 1
      %p38 = scmp.ne.s32.totalorder %s33, %s35
      %p39 = scmp.eq.s32.totalorder %s13, 0
      %p40 = por %p38, %p39
      %p41 = scmp.ne.s32.totalorder %s33, %s35
      %p42 = scmp.eq.s32.totalorder %s18, 1
      %p43 = por %p41, %p42
      %p44 = scmp.ne.s32.totalorder %s35, %s36
      %p45 = scmp.eq.s32.totalorder %s18, 0
      %p46 = por %p44, %p45
      %p47 = scmp.ne.s32.totalorder %s35, %s36
      %p48 = scmp.eq.s32.totalorder %s19, 1
      %p49 = por %p47, %p48
      %p51 = scmp.ne.s32.totalorder %s36, %s50
      %p52 = scmp.eq.s32.totalorder %s19, 0
      %p53 = por %p51, %p52
      %s54 = ssub.s32 %s21, %s28
      %p55 = scmp.eq.s32.totalorder %s54, 0
      %s57 = sadd.s32 %s56, 1
      %s58 = scalar_select %p55, %s56, %s57
      %p61 = pneg %p55
      %p62 = scmp.eq.s32.totalorder %s13, 1
      %p63 = por %p61, %p62
      %p64 = scmp.ne.s32.totalorder %s56, %s59
      %p65 = scmp.eq.s32.totalorder %s13, 0
      %p66 = por %p64, %p65
      %p67 = scmp.ne.s32.totalorder %s56, %s59
      %p68 = scmp.eq.s32.totalorder %s18, 1
      %p69 = por %p67, %p68
      %p70 = scmp.ne.s32.totalorder %s59, %s60
      %p71 = scmp.eq.s32.totalorder %s18, 0
      %p72 = por %p70, %p71
      %p73 = scmp.ne.s32.totalorder %s59, %s60
      %p74 = scmp.eq.s32.totalorder %s19, 1
      %p75 = por %p73, %p74
      %p77 = scmp.ne.s32.totalorder %s60, %s76
      %p78 = scmp.eq.s32.totalorder %s19, 0
      %p79 = por %p77, %p78
      %s80 = ssub.s32 %s20, %s32
      %p81 = scmp.eq.s32.totalorder %s80, 0
      %s83 = sadd.s32 %s82, 1
      %s84 = scalar_select %p81, %s82, %s83
      %p87 = pneg %p81
      %p88 = scmp.eq.s32.totalorder %s13, 1
      %p89 = por %p87, %p88
      %p90 = scmp.ne.s32.totalorder %s82, %s85
      %p91 = scmp.eq.s32.totalorder %s13, 0
      %p92 = por %p90, %p91
      %p93 = scmp.ne.s32.totalorder %s82, %s85
      %p94 = scmp.eq.s32.totalorder %s18, 1
      %p95 = por %p93, %p94
      %p96 = scmp.ne.s32.totalorder %s85, %s86
      %p97 = scmp.eq.s32.totalorder %s18, 0
      %p98 = por %p96, %p97
      %p99 = scmp.ne.s32.totalorder %s85, %s86
      %p100 = scmp.eq.s32.totalorder %s19, 1
      %p101 = por %p99, %p100
      %p103 = scmp.ne.s32.totalorder %s86, %s102
      %p104 = scmp.eq.s32.totalorder %s19, 0
      %p105 = por %p103, %p104
      %s106 = ssub.s32 %s21, %s28
      %s107 = ssub.s32 %s20, %s32
      %s108 = sor.u32 %s106, %s107
      %p109 = scmp.eq.s32.totalorder %s108, 0
      %s111 = sadd.s32 %s110, 1
      %s112 = scalar_select %p109, %s110, %s111
      %p115 = pneg %p109
      %p116 = scmp.eq.s32.totalorder %s13, 1
      %p117 = por %p115, %p116
      %p118 = scmp.ne.s32.totalorder %s110, %s113
      %p119 = scmp.eq.s32.totalorder %s13, 0
      %p120 = por %p118, %p119
      %p121 = scmp.ne.s32.totalorder %s110, %s113
      %p122 = scmp.eq.s32.totalorder %s18, 1
      %p123 = por %p121, %p122
      %p124 = scmp.ne.s32.totalorder %s113, %s114
      %p125 = scmp.eq.s32.totalorder %s18, 0
      %p126 = por %p124, %p125
      %p127 = scmp.ne.s32.totalorder %s113, %s114
      %p128 = scmp.eq.s32.totalorder %s19, 1
      %p129 = por %p127, %p128
      %p131 = scmp.ne.s32.totalorder %s114, %s130
      %p132 = scmp.eq.s32.totalorder %s19, 0
      %p133 = por %p131, %p132
      %p134 = scmp.le.s32.totalorder 1, %s13
      %p135 = scmp.lt.s32.totalorder %s13, 3
      %p136 = pnand %p134, %p135
      %p137 = pneg %p136
      // Predicated region
      $region9: #{tpu_custom_call.1} parent=5 // pred_check
        _
      $region10: #{tpu_custom_call.1} parent=5 // pred_check_branch
        %139 = sbr.rel (%p136) target = $region12
      $region11: #{tpu_custom_call.1} parent=5 // pred_region
        %s140 = ssub.s32 %s13, 1
        // Predicated region
        $region13: #{tpu_custom_call.1} parent=11 // pred_check
          %p141 = pneg %p46
        $region14: #{tpu_custom_call.1} parent=11 // pred_check_branch
          %143 = sbr.rel (%p141) target = $region16
        $region15: #{tpu_custom_call.1} parent=11 // pred_region
          %s145 = ssub.s32 16, 16
          %146 = vsyncadd [#allocation4], %s145
          %s148 = sshll.u32 %s0, 4
          %s149 = int_to_ptr.vmem [resolvable:$true] %s148
          %151 = dma.vmem_to_smem %s149, 16, [#allocation2], [#allocation4]
        $region16: #{tpu_custom_call.1} parent=11 // pred_fallthru
          _
        // Predicated region
        $region17: #{tpu_custom_call.1} parent=11 // pred_check
          %p152 = pneg %p98
        $region18: #{tpu_custom_call.1} parent=11 // pred_check_branch
          %154 = sbr.rel (%p152) target = $region20
        $region19: #{tpu_custom_call.1} parent=11 // pred_region
          %p155 = scmp.lt.s32.totalorder %s22, 0
          %s156 = scalar_select %p155, %s22, 0
          %s157 = smul.addr %s156, 2
          %s158 = scalar_lea.vmem %s2, %s157
        $region20: #{tpu_custom_call.1} parent=11 // pred_fallthru
          _
      $region12: #{tpu_custom_call.1} parent=5 // pred_fallthru
        _
      %p159 = scmp.lt.s32.totalorder %s13, 2
      // Predicated region
      $region21: #{tpu_custom_call.1} parent=5 // pred_check
        %p160 = pneg %p159
      $region22: #{tpu_custom_call.1} parent=5 // pred_check_branch
        %162 = sbr.rel (%p160) target = $region24
      $region23: #{tpu_custom_call.1} parent=5 // pred_region
        // Predicated region
        $region25: #{tpu_custom_call.1} parent=23 // pred_check
          %p163 = pneg %p66
        $region26: #{tpu_custom_call.1} parent=23 // pred_check_branch
          %165 = sbr.rel (%p163) target = $region28
        $region27: #{tpu_custom_call.1} parent=23 // pred_region
          %s166 = smul.u32 4, %s21
          %p167 = scmp.lt.s32.totalorder %s166, 7
          %s168 = scalar_select %p167, %s166, 7
          %s169 = smul.addr %s168, 8
          %s170 = scalar_lea.vmem %s1, %s169
          %s171 = smul.u32 4, %s21
        $region28: #{tpu_custom_call.1} parent=23 // pred_fallthru
          _
      $region24: #{tpu_custom_call.1} parent=5 // pred_fallthru
        _
      %p172 = scmp.le.s32.totalorder 1, %s13
      %p173 = scmp.lt.s32.totalorder %s13, 3
      %p174 = pnand %p172, %p173
      %p175 = pneg %p174
      // Predicated region
      $region29: #{tpu_custom_call.1} parent=5 // pred_check
        _
      $region30: #{tpu_custom_call.1} parent=5 // pred_check_branch
        %177 = sbr.rel (%p174) target = $region32
      $region31: #{tpu_custom_call.1} parent=5 // pred_region
        %s178 = ssub.s32 %s13, 1
        // Predicated region
        $region33: #{tpu_custom_call.1} parent=31 // pred_check
          %p179 = pneg %p46
        $region34: #{tpu_custom_call.1} parent=31 // pred_check_branch
          %181 = sbr.rel (%p179) target = $region36
        $region35: #{tpu_custom_call.1} parent=31 // pred_region
          %182 = dma.done [#allocation4], 16
        $region36: #{tpu_custom_call.1} parent=31 // pred_fallthru
          _
        %183 = sfence
        %p184 = pneg %p46
        %p185 = pneg %p43
        %s186 = smul.u32 4, %s23
        %p187 = scmp.lt.s32.totalorder %s186, 7
        %s188 = scalar_select %p187, %s186, 7
        %s189 = smul.addr %s188, 8
        %s190 = scalar_lea.vmem %s1, %s189
        %p191 = pneg %p72
        %p192 = pneg %p69
        %p193 = scmp.lt.s32.totalorder %s22, 0
        %s194 = scalar_select %p193, %s22, 0
        %s195 = smul.addr %s194, 2
        %s196 = scalar_lea.vmem %s2, %s195
        %p197 = pneg %p98
        %p198 = pneg %p95
        %p199 = pneg %p126
        %p200 = pneg %p123
        %s201 = sand.u32 %s113, 1
        %s202 = scalar_lea.sflag [#allocation3], %s201
        %s203 = sand.u32 %s113, 1
        %s204 = smul.addr %s203, 32
        %s205 = scalar_lea.vmem [#allocation5], %s204
        %s206 = smul.u32 4, %s23
        %p207 = scmp.lt.s32.totalorder %s206, 7
        %s208 = scalar_select %p207, %s206, 7
        %s209 = smul.addr %s208, 8
        %s210 = scalar_lea.vmem %s1, %s209
        %s211 = smul.u32 4, %s23
        %p212 = scmp.lt.s32.totalorder %s22, 0
        %s213 = scalar_select %p212, %s22, 0
        %s214 = smul.addr %s213, 2
        %s215 = scalar_lea.vmem %s2, %s214
        %s216 = smul.u32 4, %s23
        %s217 = sld [smem:[#allocation2]]
        %s218 = sld [smem:[#allocation2 + $0x1]]
        %v219 = vld [vmem:[%s210] sm:$0xff]
        %v220 = vld [vmem:[%s210 + $0x8] sm:$0xff]
        %v221 = vld [vmem:[%s210 + $0x10] sm:$0xff]
        %v222 = vld [vmem:[%s210 + $0x18] sm:$0xff]
        %v223 = vld [vmem:[%s215] sm:$0x3]
        %225 = vset.pattern.permute.xlu0 0
        %226 = vperm.xlu0 %225, %v219
        %v227 = vpop.permute.xlu0 %226
        %230 = vset.pattern.permute.xlu0 0
        %231 = vperm.xlu0 %230, %v220
        %v232 = vpop.permute.xlu0 %231
        %235 = vset.pattern.permute.xlu0 0
        %236 = vperm.xlu0 %235, %v221
        %v237 = vpop.permute.xlu0 %236
        %240 = vset.pattern.permute.xlu0 0
        %241 = vperm.xlu0 %240, %v222
        %v242 = vpop.permute.xlu0 %241
        %v244 = vlaneseq
        %v245 = vshrl.u32 %v244, 7
        %v246 = vsub.s32 0, %v245
        %v247 = vrot.slane %v223, %v246
        %v248 = vsub.f32 %v227, %v247
        %v249 = vsub.f32 %v232, %v247
        %v250 = vsub.f32 %v237, %v247
        %v251 = vsub.f32 %v242, %v247
        %v252 = vmul.f32 %v248, %v248
        %v253 = vmul.f32 %v249, %v249
        %v254 = vmul.f32 %v250, %v250
        %v255 = vmul.f32 %v251, %v251
        %v256 = vadd.f32 %v252, 0.0
        %v257 = vadd.f32 %v253, 0.0
        %v258 = vadd.f32 %v254, 0.0
        %v259 = vadd.f32 %v255, 0.0
        %260 = vset.pattern.permute.xlu0 1
        %261 = vperm.xlu0 %260, %v219
        %v262 = vpop.permute.xlu0 %261
        %264 = vset.pattern.permute.xlu0 1
        %265 = vperm.xlu0 %264, %v220
        %v266 = vpop.permute.xlu0 %265
        %268 = vset.pattern.permute.xlu0 1
        %269 = vperm.xlu0 %268, %v221
        %v270 = vpop.permute.xlu0 %269
        %272 = vset.pattern.permute.xlu0 1
        %273 = vperm.xlu0 %272, %v222
        %v274 = vpop.permute.xlu0 %273
        %v276 = vlaneseq
        %v277 = vshrl.u32 %v276, 7
        %v278 = vsub.s32 1, %v277
        %v279 = vrot.slane %v223, %v278
        %v280 = vsub.f32 %v262, %v279
        %v281 = vsub.f32 %v266, %v279
        %v282 = vsub.f32 %v270, %v279
        %v283 = vsub.f32 %v274, %v279
        %v284 = vmul.f32 %v280, %v280
        %v285 = vmul.f32 %v281, %v281
        %v286 = vmul.f32 %v282, %v282
        %v287 = vmul.f32 %v283, %v283
        %v288 = vadd.f32 %v256, %v284
        %v289 = vadd.f32 %v257, %v285
        %v290 = vadd.f32 %v258, %v286
        %v291 = vadd.f32 %v259, %v287
        %v292 = vmax.f32 %v288, 1e-30
        %v293 = vmax.f32 %v289, 1e-30
        %v294 = vmax.f32 %v290, 1e-30
        %v295 = vmax.f32 %v291, 1e-30
        %v296 = vstv %s217
        %v297 = vmul.f32 %v292, %v296
        %v298 = vmul.f32 %v293, %v296
        %v299 = vmul.f32 %v294, %v296
        %v300 = vmul.f32 %v295, %v296
        %v301 = vrsqrt.pop %v297
        %v302 = vmul.f32 %v297, %v301
        %vm303 = vcmp.eq.f32.partialorder %v297, inf
        %v304 = vsel %vm303, %v297, %v302
        %vm305 = vcmp.eq.f32.partialorder %v297, 0.0
        %v306 = vand.u32 %v297, 2147483648
        %v307 = vsel %vm305, %v306, %v304
        %v308 = vrsqrt.pop %v298
        %v309 = vmul.f32 %v298, %v308
        %vm310 = vcmp.eq.f32.partialorder %v298, inf
        %v311 = vsel %vm310, %v298, %v309
        %vm312 = vcmp.eq.f32.partialorder %v298, 0.0
        %v313 = vand.u32 %v298, 2147483648
        %v314 = vsel %vm312, %v313, %v311
        %v315 = vrsqrt.pop %v299
        %v316 = vmul.f32 %v299, %v315
        %vm317 = vcmp.eq.f32.partialorder %v299, inf
        %v318 = vsel %vm317, %v299, %v316
        %vm319 = vcmp.eq.f32.partialorder %v299, 0.0
        %v320 = vand.u32 %v299, 2147483648
        %v321 = vsel %vm319, %v320, %v318
        %v322 = vrsqrt.pop %v300
        %v323 = vmul.f32 %v300, %v322
        %vm324 = vcmp.eq.f32.partialorder %v300, inf
        %v325 = vsel %vm324, %v300, %v323
        %vm326 = vcmp.eq.f32.partialorder %v300, 0.0
        %v327 = vand.u32 %v300, 2147483648
        %v328 = vsel %vm326, %v327, %v325
        %v329 = vsub.f32 0.0, %v307
        %v330 = vsub.f32 0.0, %v314
        %v331 = vsub.f32 0.0, %v321
        %v332 = vsub.f32 0.0, %v328
        %v333 = vmul.f32 %v329, 1.442695
        %v334 = vpow.pop %v333
        %v335 = vmul.f32 %v330, 1.442695
        %v336 = vpow.pop %v335
        %v337 = vmul.f32 %v331, 1.442695
        %v338 = vpow.pop %v337
        %v339 = vmul.f32 %v332, 1.442695
        %v340 = vpow.pop %v339
        %v341 = vmul.f32 %v297, 0.33333334
        %v342 = vmul.f32 %v298, 0.33333334
        %v343 = vmul.f32 %v299, 0.33333334
        %v344 = vmul.f32 %v300, 0.33333334
        %v345 = vadd.f32 %v341, %v307
        %v346 = vadd.f32 %v342, %v314
        %v347 = vadd.f32 %v343, %v321
        %v348 = vadd.f32 %v344, %v328
        %v349 = vadd.f32 %v345, 1.0
        %v350 = vadd.f32 %v346, 1.0
        %v351 = vadd.f32 %v347, 1.0
        %v352 = vadd.f32 %v348, 1.0
        %v353 = vmul.f32 %v334, %v349
        %v354 = vmul.f32 %v336, %v350
        %v355 = vmul.f32 %v338, %v351
        %v356 = vmul.f32 %v340, %v352
        %v357 = vstv %s218
        %v358 = vmul.f32 %v353, %v357
        %v359 = vmul.f32 %v354, %v357
        %v360 = vmul.f32 %v355, %v357
        %v361 = vmul.f32 %v356, %v357
        %362 = vst [vmem:[%s205] sm:$0xff] %v358
        %363 = vst [vmem:[%s205 + $0x8] sm:$0xff] %v359
        %364 = vst [vmem:[%s205 + $0x10] sm:$0xff] %v360
        %365 = vst [vmem:[%s205 + $0x18] sm:$0xff] %v361
        %s366 = sand.u32 %s113, 1
        %s367 = scalar_lea.sflag [#allocation3], %s366
        %s368 = sand.u32 %s113, 1
        %s369 = smul.addr %s368, 32
        %s370 = scalar_lea.vmem [#allocation5], %s369
        // Predicated region
        $region37: #{tpu_custom_call.1} parent=31 // pred_check
          %p371 = pneg %p123
        $region38: #{tpu_custom_call.1} parent=31 // pred_check_branch
          %373 = sbr.rel (%p371) target = $region40
        $region39: #{tpu_custom_call.1} parent=31 // pred_region
          %s374 = smul.u32 4, %s23
          %s376 = ssub.s32 512, 512
          %377 = vsyncadd %s367, %s376
          %s378 = sadd.s32 %s22, %s374
          %s379 = smul.addr %s378, 128
          %s380 = scalar_lea.hbm %s3, %s379
          %s381 = sshll.u32 %s370, 4
          %s382 = int_to_ptr.vmem [resolvable:$true] %s381
          %387 = dma.vmem_to_hbm [thread:$0]  %s382, 512, %s380, %s367, 128, 128, 8
        $region40: #{tpu_custom_call.1} parent=31 // pred_fallthru
          _
      $region32: #{tpu_custom_call.1} parent=5 // pred_fallthru
        _
      %p388 = scmp.le.s32.totalorder 2, %s13
      // Predicated region
      $region41: #{tpu_custom_call.1} parent=5 // pred_check
        %p389 = pneg %p388
      $region42: #{tpu_custom_call.1} parent=5 // pred_check_branch
        %391 = sbr.rel (%p389) target = $region44
      $region43: #{tpu_custom_call.1} parent=5 // pred_region
        %s392 = ssub.s32 %s13, 2
        // Predicated region
        $region45: #{tpu_custom_call.1} parent=43 // pred_check
          %p393 = pneg %p129
        $region46: #{tpu_custom_call.1} parent=43 // pred_check_branch
          %395 = sbr.rel (%p393) target = $region48
        $region47: #{tpu_custom_call.1} parent=43 // pred_region
          %s396 = sand.u32 %s114, 1
          %s397 = scalar_lea.sflag [#allocation3], %s396
          %s398 = sand.u32 %s114, 1
          %s399 = smul.addr %s398, 32
          %s400 = scalar_lea.vmem [#allocation5], %s399
          %401 = dma.done %s397, 512
        $region48: #{tpu_custom_call.1} parent=43 // pred_fallthru
          _
      $region44: #{tpu_custom_call.1} parent=5 // pred_fallthru
        _
    $region6: #{tpu_custom_call.1} parent=1 // loop_footer
      %s17 = sadd.s32 1, %s13
    $region7: #{tpu_custom_call.1} parent=1 // loop_footer_branch
      %12 = sbr.rel target = $region3
    $region8: #{tpu_custom_call.1} parent=1 // loop_exit
      _
    %402 = vsyncpa [#allocation3], 1
    %s403 = scalar_lea.sflag [#allocation3], 1
    %404 = vsyncpa %s403, 1
    %405 = vsyncpa [#allocation4], 1
    %s406 = scalar_lea.sflag [#allocation4], 1
    %407 = vsyncpa %s406, 1

</llo_original>
